<compile_context>
chip_gen: v5e
topology: v5e:2x2
jax: 0.10.0
libtpu: 0.0.40
codegen_flags: <defaults>
</compile_context>

<pallas_src>
import functools

import jax
import jax.numpy as jnp
from jax import lax
from jax.experimental import pallas as pl
from jax.experimental.pallas import tpu as pltpu


def _classifier_head_kernel(x_ref, w_ref, b_ref, o_ref):
    # x: (TB, D), w: (C, D) [second logit group], b: (1, C)  ->  o: (TB, C)
    y = lax.dot_general(
        x_ref[...], w_ref[...],
        dimension_numbers=(((1,), (1,)), ((), ())),   # contract on D
        preferred_element_type=jnp.float32)
    o_ref[...] = (y + b_ref[...]).astype(o_ref.dtype)


@functools.partial(jax.jit, static_argnames=("num_classes", "tile_rows"))
def muti_classifier_forward(feats, weight, bias, *, num_classes, tile_rows=None):
    """MutiClassifier_.forward on precomputed backbone features.

    feats:  (B, feature_dim)              output of self.net(x)
    weight: (2*num_classes, feature_dim)  PyTorch nn.Linear layout (out, in)
    bias:   (2*num_classes,)
    returns (B, num_classes) == (feats @ W.T + b).view(B, 2, -1)[:, 1, :]
    """
    B, D = feats.shape
    C = num_classes
    assert weight.shape == (2 * C, D) and bias.shape == (2 * C,)

    # Free reshapes only (contiguous, no transpose / materialized slice): the
    # second logit group is selected inside the pallas_call via block index 1
    # on the leading (group) axis.
    w3 = weight.reshape(2, C, D)
    b3 = bias.reshape(2, 1, C)

    # VMEM-aware batch tiling.
    itemsize = jnp.dtype(feats.dtype).itemsize
    bytes_per_row = max(1, D * itemsize)
    max_tile_bytes = 4 << 20                                   # per feats buffer
    tb_cap = max(8, min(1024, (max_tile_bytes // bytes_per_row) // 8 * 8))
    if tile_rows is not None:                                   # test/override hook
        tb_cap = max(8, (tile_rows // 8) * 8)
    # Either the whole batch in one block (block dim == full dim is always
    # legal), or a multiple-of-8 tile with a cdiv grid (last block masked).
    TB = B if B <= tb_cap else tb_cap
    grid = (pl.cdiv(B, TB),)

    return pl.pallas_call(
        _classifier_head_kernel,
        out_shape=jax.ShapeDtypeStruct((B, C), feats.dtype),
        grid=grid,
        in_specs=[
            pl.BlockSpec((TB, D), lambda i: (i, 0)),           # feats, batch-tiled
            pl.BlockSpec((None, C, D), lambda i: (1, 0, 0)),   # 2nd weight half, resident
            pl.BlockSpec((None, 1, C), lambda i: (1, 0, 0)),   # 2nd bias half, resident
        ],
        out_specs=pl.BlockSpec((TB, C), lambda i: (i, 0)),
        compiler_params=pltpu.CompilerParams(
            dimension_semantics=("parallel",)),                 # shards batch tiles on v7x
    )(feats, w3, b3)


def _reference(feats, weight, bias, num_classes):
    """Pure-JAX reference matching the PyTorch forward."""
    y = feats @ weight.T + bias
    y = y.reshape(feats.shape[0], 2, num_classes)
    return y[:, 1, :]


def _run_case(key, B, D, num_classes, tile_rows=None):
    k0, k1, k2 = jax.random.split(key, 3)
    feats = jax.random.normal(k0, (B, D), jnp.float32)
    # xavier_uniform_(weight, gain=0.1) equivalent.
    bound = 0.1 * (6.0 / (D + 2 * num_classes)) ** 0.5
    weight = jax.random.uniform(k1, (2 * num_classes, D), jnp.float32,
                                minval=-bound, maxval=bound)
    # Module inits bias to 0; use small nonzero values to exercise the add path.
    bias = 0.01 * jax.random.normal(k2, (2 * num_classes,), jnp.float32)

    out = jax.block_until_ready(
        muti_classifier_forward(feats, weight, bias,
                                num_classes=num_classes, tile_rows=tile_rows))
    ref = jax.block_until_ready(_reference(feats, weight, bias, num_classes))
    assert out.shape == (B, num_classes), out.shape
    err = float(jnp.max(jnp.abs(out - ref)))
    assert err < 2e-3, err


if __name__ == "__main__":
    key = jax.random.PRNGKey(0)
    ka, kb = jax.random.split(key)

    # Module-default shapes (feature_dim=512), whole batch in one block.
    _run_case(ka, B=2, D=512, num_classes=8)

    # Exercise the tiled path: multi-step cdiv grid with a partial last block.
    _run_case(kb, B=20, D=256, num_classes=8, tile_rows=8)

    print("KERNEL_OK")
</pallas_src>

<mosaic_0001>
module attributes {stable_mosaic.version = 11 : i64} {
  func.func @_classifier_head_kernel(%arg0: i32, %arg1: memref<2x512xf32, #tpu.memory_space<vmem>>, %arg2: memref<1x8x512xf32, #tpu.memory_space<vmem>>, %arg3: memref<1x1x8xf32, #tpu.memory_space<vmem>>, %arg4: memref<2x8xf32, #tpu.memory_space<vmem>>) attributes {dimension_semantics = [#tpu.dimension_semantics<parallel>], iteration_bounds = array<i64: 1>, scalar_prefetch = 0 : i64, scratch_operands = 0 : i64, tpu.core_type = #tpu.core_type<tc>, window_params = [{transform_indices = @transform_0, window_bounds = array<i64: 2, 512>}, {transform_indices = @transform_1, window_bounds = array<i64: 1, 8, 512>}, {transform_indices = @transform_2, window_bounds = array<i64: 1, 1, 8>}, {transform_indices = @transform_3, window_bounds = array<i64: 2, 8>}]} {
    %c0 = arith.constant 0 : index
    %c0_0 = arith.constant 0 : index
    %0 = vector.load %arg1[%c0, %c0_0] : memref<2x512xf32, #tpu.memory_space<vmem>>, vector<2x512xf32>
    %c0_1 = arith.constant 0 : index
    %c0_2 = arith.constant 0 : index
    %c0_3 = arith.constant 0 : index
    %1 = vector.load %arg2[%c0_1, %c0_2, %c0_3] : memref<1x8x512xf32, #tpu.memory_space<vmem>>, vector<1x8x512xf32>
    %2 = vector.shape_cast %1 : vector<1x8x512xf32> to vector<8x512xf32>
    %cst = arith.constant dense<0.000000e+00> : vector<2x8xf32>
    %3 = tpu.matmul %0, %2, %cst {dimension_numbers = #tpu.dot_dimension_numbers<[1], [1], [0], [0], [0, 0, 1, 0], [], []>} : vector<2x512xf32>, vector<8x512xf32>, vector<2x8xf32> -> vector<2x8xf32>
    %c0_4 = arith.constant 0 : index
    %c0_5 = arith.constant 0 : index
    %c0_6 = arith.constant 0 : index
    %4 = vector.load %arg3[%c0_4, %c0_5, %c0_6] : memref<1x1x8xf32, #tpu.memory_space<vmem>>, vector<1x1x8xf32>
    %5 = vector.shape_cast %4 : vector<1x1x8xf32> to vector<1x8xf32>
    %6 = vector.broadcast %5 : vector<1x8xf32> to vector<2x8xf32>
    %7 = arith.addf %3, %6 : vector<2x8xf32>
    %c0_7 = arith.constant 0 : index
    %c0_8 = arith.constant 0 : index
    %8 = vector.load %arg4[%c0_7, %c0_8] : memref<2x8xf32, #tpu.memory_space<vmem>>, vector<2x8xf32>
    tpu.vector_store %arg4[%c0_7, %c0_8], %7 {strides = array<i32>} : memref<2x8xf32, #tpu.memory_space<vmem>>, vector<2x8xf32>,
    return
  }
  func.func @transform_0(%arg0: i32) -> (i32, i32) {
    %c0_i32 = arith.constant 0 : i32
    %c0_i32_0 = arith.constant 0 : i32
    return %arg0, %c0_i32 : i32, i32
  }
  func.func @transform_1(%arg0: i32) -> (i32, i32, i32) {
    %c1_i32 = arith.constant 1 : i32
    %c0_i32 = arith.constant 0 : i32
    %c0_i32_0 = arith.constant 0 : i32
    %c0_i32_1 = arith.constant 0 : i32
    return %c1_i32, %c0_i32, %c0_i32_0 : i32, i32, i32
  }
  func.func @transform_2(%arg0: i32) -> (i32, i32, i32) {
    %c1_i32 = arith.constant 1 : i32
    %c0_i32 = arith.constant 0 : i32
    %c0_i32_0 = arith.constant 0 : i32
    %c0_i32_1 = arith.constant 0 : i32
    return %c1_i32, %c0_i32, %c0_i32_0 : i32, i32, i32
  }
  func.func @transform_3(%arg0: i32) -> (i32, i32) {
    %c0_i32 = arith.constant 0 : i32
    %c0_i32_0 = arith.constant 0 : i32
    return %arg0, %c0_i32 : i32, i32
  }
}

</mosaic_0001>

<llo_original>
// kernel: muti_classifier_forward.1
$region0: #{muti_classifier_forward.1}
  #allocation0 [shape = 'u32[]', space=smem, size = 0x4, offset = 0x4, fixed_abs, tag = 'smem constant byte address 0x4 - core index']
  #allocation1 [shape = 'u32[72,128]{1,0:T(1,128)}', space=vmem, size = 0x9000, scoped, tag = 'internal scratch']
  %s0 = inlined_call_operand.hbm [shape: f32[2,512], index: 0, kind: input, shape index: {}]
  %s1 = inlined_call_operand.hbm [shape: f32[2,8,512], index: 1, kind: input, shape index: {}]
  %s2 = inlined_call_operand.vmem [shape: f32[2,1,8], index: 2, kind: input, shape index: {}]
  %s3 = inlined_call_operand.hbm [shape: f32[2,8], index: 3, kind: output, shape index: {}]
  %s4 = sld [smem:[#allocation0]]
  $region30: #{muti_classifier_forward.1} parent=0
    _
  %s6 = ssub.s32 1, %s4
  %s7 = scalar_select 0, %s6, %s4
  $region1: #{muti_classifier_forward.1} parent=0
    #allocation2 [shape = 'u8[4096]{0}', space=vmem, size = 0x1000, scoped, tag = 'input window, operand 0, single buffered']
    #allocation3 [shape = 's32[1]{0}', space=sflag, size = 0x4, scoped, tag = 'scoped memory for muti_classifier_forward.1']
    #allocation4 [shape = 's32[1]{0}', space=sflag, size = 0x4, scoped, tag = 'scoped memory for muti_classifier_forward.1']
    #allocation5 [shape = 'u8[16384]{0}', space=vmem, size = 0x4000, scoped, tag = 'input window, operand 1, single buffered']
    #allocation6 [shape = 's32[1]{0}', space=sflag, size = 0x4, scoped, tag = 'scoped memory for muti_classifier_forward.1']
    #allocation7 [shape = 'u8[1024]{0}', space=vmem, size = 0x400, scoped, tag = 'output window, operand 0, single buffered']
    %8 = vsyncpa [#allocation3], 0
    %9 = vsyncpa [#allocation6], 0
    %10 = vsyncpa [#allocation4], 0
    // Predicated region
    $region2: #{muti_classifier_forward.1} parent=1 // pred_check
      _
    $region3: #{muti_classifier_forward.1} parent=1 // pred_check_branch
      %12 = sbr.rel (0) target = $region5
    $region4: #{muti_classifier_forward.1} parent=1 // pred_region
      %14 = vsyncadd [#allocation3], 0
      %s16 = sshll.u32 %s0, 4
      %s17 = int_to_ptr.hbm [resolvable:$true] %s16
      %s18 = sshll.u32 [#allocation2], 4
      %s19 = int_to_ptr.vmem [resolvable:$true] %s18
      %21 = dma.hbm_to_vmem [thread:$0]  %s17, 128, %s19, [#allocation3]
    $region5: #{muti_classifier_forward.1} parent=1 // pred_fallthru
      _
    // Predicated region
    $region6: #{muti_classifier_forward.1} parent=1 // pred_check
      _
    $region7: #{muti_classifier_forward.1} parent=1 // pred_check_branch
      %23 = sbr.rel (0) target = $region9
    $region8: #{muti_classifier_forward.1} parent=1 // pred_region
      %25 = vsyncadd [#allocation6], 0
      %s26 = scalar_lea.hbm %s1, 32
      %s28 = sshll.u32 %s26, 4
      %s29 = int_to_ptr.hbm [resolvable:$true] %s28
      %s30 = sshll.u32 [#allocation5], 4
      %s31 = int_to_ptr.vmem [resolvable:$true] %s30
      %33 = dma.hbm_to_vmem [thread:$0]  %s29, 512, %s31, [#allocation6]
    $region9: #{muti_classifier_forward.1} parent=1 // pred_fallthru
      _
    // Predicated region
    $region10: #{muti_classifier_forward.1} parent=1 // pred_check
      _
    $region11: #{muti_classifier_forward.1} parent=1 // pred_check_branch
      %35 = sbr.rel (0) target = $region13
    $region12: #{muti_classifier_forward.1} parent=1 // pred_region
      %s36 = scalar_lea.vmem %s2, 1
    $region13: #{muti_classifier_forward.1} parent=1 // pred_fallthru
      _
    // Predicated region
    $region14: #{muti_classifier_forward.1} parent=1 // pred_check
      _
    $region15: #{muti_classifier_forward.1} parent=1 // pred_check_branch
      %38 = sbr.rel (0) target = $region17
    $region16: #{muti_classifier_forward.1} parent=1 // pred_region
      %40 = dma.done [#allocation3], 128
    $region17: #{muti_classifier_forward.1} parent=1 // pred_fallthru
      _
    // Predicated region
    $region18: #{muti_classifier_forward.1} parent=1 // pred_check
      _
    $region19: #{muti_classifier_forward.1} parent=1 // pred_check_branch
      %42 = sbr.rel (0) target = $region21
    $region20: #{muti_classifier_forward.1} parent=1 // pred_region
      %44 = dma.done [#allocation6], 512
    $region21: #{muti_classifier_forward.1} parent=1 // pred_fallthru
      _
    %s45 = scalar_lea.vmem %s2, 1
    %s46 = scalar_lea.vmem %s2, 1
    %v47 = vld [vmem:[#allocation2] sm:$0xff]
    %v48 = vld [vmem:[#allocation5] sm:$0xff]
    %v49 = vld [vmem:[#allocation5 + $0x8] sm:$0xff]
    %v50 = vld [vmem:[#allocation5 + $0x10] sm:$0xff]
    %v51 = vld [vmem:[#allocation5 + $0x18] sm:$0xff]
    %v52 = vld [vmem:[%s46] sm:$0x1]
    %v54 = vperm.slane %v52, 0
    %57 = vst [vmem:[#allocation1] ss:$4 sm:$0xff] %v47
    %v58 = vld.sshfl [vmem:[#allocation1] sm:$0xff pattern:$0x73625140]
    %v59 = vld.sshfl [vmem:[#allocation1 + $0x8] sm:$0xff pattern:$0x73625140]
    %v60 = vld.sshfl [vmem:[#allocation1 + $0x10] sm:$0xff pattern:$0x73625140]
    %v61 = vld.sshfl [vmem:[#allocation1 + $0x18] sm:$0xff pattern:$0x73625140]
    %66 = vmatpush.xpose.msra.mxu0 0.0
    %67 = vmatpush.xpose.msra.mxu0 0.0
    %68 = vmatpush.xpose.msra.mxu0 0.0
    %69 = vmatpush.xpose.msra.mxu0 0.0
    %70 = vmatpush.xpose.msra.mxu0 0.0
    %71 = vmatpush.xpose.msra.mxu0 0.0
    %72 = vmatpush.xpose.msra.mxu0 0.0
    %73 = vmatpush.xpose.msra.mxu0 0.0
    %74 = vmatpush.xpose.msra.mxu0 0.0
    %75 = vmatpush.xpose.msra.mxu0 0.0
    %76 = vmatpush.xpose.msra.mxu0 0.0
    %77 = vmatpush.xpose.msra.mxu0 0.0
    %78 = vmatpush.xpose.msra.mxu0 0.0
    %79 = vmatpush.xpose.msra.mxu0 0.0
    %80 = vmatpush.xpose.msra.mxu0 0.0
    %81 = vmatpush.xpose.msra.mxu0 %v48
    %82 = vmatmul.f32.gmra.mxu0 %v58
    %v83 = vpop.f32.mrf.mxu0
    %v84 = vadd.f32 %v54, %v83
    %85 = vdwg.mxu0
    %86 = vmatpush.xpose.msra.mxu0 0.0
    %87 = vmatpush.xpose.msra.mxu0 0.0
    %88 = vmatpush.xpose.msra.mxu0 0.0
    %89 = vmatpush.xpose.msra.mxu0 0.0
    %90 = vmatpush.xpose.msra.mxu0 0.0
    %91 = vmatpush.xpose.msra.mxu0 0.0
    %92 = vmatpush.xpose.msra.mxu0 0.0
    %93 = vmatpush.xpose.msra.mxu0 0.0
    %94 = vmatpush.xpose.msra.mxu0 0.0
    %95 = vmatpush.xpose.msra.mxu0 0.0
    %96 = vmatpush.xpose.msra.mxu0 0.0
    %97 = vmatpush.xpose.msra.mxu0 0.0
    %98 = vmatpush.xpose.msra.mxu0 0.0
    %99 = vmatpush.xpose.msra.mxu0 0.0
    %100 = vmatpush.xpose.msra.mxu0 0.0
    %101 = vmatpush.xpose.msra.mxu0 %v49
    %102 = vmatmul.f32.gmra.mxu0 %v59
    %v103 = vpop.f32.mrf.mxu0
    %v104 = vadd.f32 %v84, %v103
    %105 = vdwg.mxu0
    %106 = vmatpush.xpose.msra.mxu0 0.0
    %107 = vmatpush.xpose.msra.mxu0 0.0
    %108 = vmatpush.xpose.msra.mxu0 0.0
    %109 = vmatpush.xpose.msra.mxu0 0.0
    %110 = vmatpush.xpose.msra.mxu0 0.0
    %111 = vmatpush.xpose.msra.mxu0 0.0
    %112 = vmatpush.xpose.msra.mxu0 0.0
    %113 = vmatpush.xpose.msra.mxu0 0.0
    %114 = vmatpush.xpose.msra.mxu0 0.0
    %115 = vmatpush.xpose.msra.mxu0 0.0
    %116 = vmatpush.xpose.msra.mxu0 0.0
    %117 = vmatpush.xpose.msra.mxu0 0.0
    %118 = vmatpush.xpose.msra.mxu0 0.0
    %119 = vmatpush.xpose.msra.mxu0 0.0
    %120 = vmatpush.xpose.msra.mxu0 0.0
    %121 = vmatpush.xpose.msra.mxu0 %v50
    %122 = vmatmul.f32.gmra.mxu0 %v60
    %v123 = vpop.f32.mrf.mxu0
    %v124 = vadd.f32 %v104, %v123
    %125 = vdwg.mxu0
    %126 = vmatpush.xpose.msra.mxu0 0.0
    %127 = vmatpush.xpose.msra.mxu0 0.0
    %128 = vmatpush.xpose.msra.mxu0 0.0
    %129 = vmatpush.xpose.msra.mxu0 0.0
    %130 = vmatpush.xpose.msra.mxu0 0.0
    %131 = vmatpush.xpose.msra.mxu0 0.0
    %132 = vmatpush.xpose.msra.mxu0 0.0
    %133 = vmatpush.xpose.msra.mxu0 0.0
    %134 = vmatpush.xpose.msra.mxu0 0.0
    %135 = vmatpush.xpose.msra.mxu0 0.0
    %136 = vmatpush.xpose.msra.mxu0 0.0
    %137 = vmatpush.xpose.msra.mxu0 0.0
    %138 = vmatpush.xpose.msra.mxu0 0.0
    %139 = vmatpush.xpose.msra.mxu0 0.0
    %140 = vmatpush.xpose.msra.mxu0 0.0
    %141 = vmatpush.xpose.msra.mxu0 %v51
    %142 = vmatmul.f32.gmra.mxu0 %v61
    %v143 = vpop.f32.mrf.mxu0
    %v144 = vadd.f32 %v124, %v143
    %145 = vdwg.mxu0
    %vm146 = vcmask 58368
    %147 = vst.msk [vmem:[#allocation7] sm:$0x3] %vm146, %v144
    // Predicated region
    $region22: #{muti_classifier_forward.1} parent=1 // pred_check
      _
    $region23: #{muti_classifier_forward.1} parent=1 // pred_check_branch
      %149 = sbr.rel (0) target = $region25
    $region24: #{muti_classifier_forward.1} parent=1 // pred_region
      %151 = vsyncadd [#allocation4], 0
      %s153 = sshll.u32 [#allocation7], 4
      %s154 = int_to_ptr.vmem [resolvable:$true] %s153
      %s155 = sshll.u32 %s3, 4
      %s156 = int_to_ptr.hbm [resolvable:$true] %s155
      %158 = dma.vmem_to_hbm [thread:$0]  %s154, 32, %s156, [#allocation4]
    $region25: #{muti_classifier_forward.1} parent=1 // pred_fallthru
      _
    // Predicated region
    $region26: #{muti_classifier_forward.1} parent=1 // pred_check
      _
    $region27: #{muti_classifier_forward.1} parent=1 // pred_check_branch
      %160 = sbr.rel (0) target = $region29
    $region28: #{muti_classifier_forward.1} parent=1 // pred_region
      %162 = dma.done [#allocation4], 32
    $region29: #{muti_classifier_forward.1} parent=1 // pred_fallthru
      _
    %163 = vsyncpa [#allocation3], 1
    %164 = vsyncpa [#allocation6], 1
    %165 = vsyncpa [#allocation4], 1

</llo_original>
